<compile_context>
chip_gen: v7x
topology: tpu7x:2x2x1
jax: 0.10.0
libtpu: 0.0.40
codegen_flags: <defaults>
</compile_context>

<pallas_src>
import functools

import jax
import jax.numpy as jnp
from jax.experimental import pallas as pl
from jax.experimental.pallas import tpu as pltpu

K_IN = 400     # true input features; kept unpadded (full-extent block dim)
H1_PAD = 128   # 120 -> 128
H2_PAD = 128   # 84  -> 128
N_PAD = 128    # out -> 128 (lane-dense output stores)


def _round_up(x, m):
    return ((x + m - 1) // m) * m


def _pad2(a, rows, cols):
    return jnp.pad(a, ((0, rows - a.shape[0]), (0, cols - a.shape[1])))


def mlp_kernel(x_ref, w1_ref, b1_ref, w2_ref, b2_ref, w3_ref, b3_ref, o_ref):
    # x tile: (TB, 400) f32 straight from HBM; cast to bf16 here (no wrapper copy).
    # All three matmuls fused; f32 accumulation; bias add / ReLU in f32.
    x = x_ref[...].astype(jnp.bfloat16)
    h1 = jnp.dot(x, w1_ref[...], preferred_element_type=jnp.float32) + b1_ref[...]
    h1 = jnp.maximum(h1, 0.0).astype(jnp.bfloat16)
    h2 = jnp.dot(h1, w2_ref[...], preferred_element_type=jnp.float32) + b2_ref[...]
    h2 = jnp.maximum(h2, 0.0).astype(jnp.bfloat16)
    o_ref[...] = (jnp.dot(h2, w3_ref[...], preferred_element_type=jnp.float32)
                  + b3_ref[...]).astype(o_ref.dtype)


def prepare_params(params):
    """Pad + cast weights/biases ONCE, outside the per-call jitted path.

    Zero padding is exact: padded bias entries are 0, ReLU(0) = 0, and padded
    weight rows/cols contribute nothing; the wrapper slices padding away.
    """
    w1, b1, w2, b2, w3, b3 = params
    w1_p = _pad2(w1, K_IN, H1_PAD).astype(jnp.bfloat16)
    w2_p = _pad2(w2, H1_PAD, H2_PAD).astype(jnp.bfloat16)
    w3_p = _pad2(w3, H2_PAD, N_PAD).astype(jnp.bfloat16)
    b1_p = _pad2(b1, 1, H1_PAD).astype(jnp.float32)
    b2_p = _pad2(b2, 1, H2_PAD).astype(jnp.float32)
    b3_p = _pad2(b3, 1, N_PAD).astype(jnp.float32)
    out_features = int(w3.shape[1])
    return (w1_p, b1_p, w2_p, b2_p, w3_p, b3_p), out_features


@functools.partial(jax.jit, static_argnames=("out_features", "tb"))
def split_lenet3_forward(x, prepped, *, out_features=10, tb=1024):
    """x: (B, 400) f32.  prepped: output of prepare_params (padded bf16/f32)."""
    w1_p, b1_p, w2_p, b2_p, w3_p, b3_p = prepped
    B, K = x.shape
    assert K == K_IN

    # Batch tiling: >= 8 rows/step, padding bounded to a handful of rows, and
    # >= 2 grid steps whenever possible so v7x can shard across both TensorCores.
    B8 = _round_up(B, 8)
    n_steps = max(pl.cdiv(B8, tb), 2 if B8 >= 16 else 1)
    TB = _round_up(pl.cdiv(B8, n_steps), 8)
    n_steps = pl.cdiv(B8, TB)
    B_P = n_steps * TB

    # Row-only zero pad (no feature pad, no dtype convert -> no big HBM round
    # trip; a no-op when B_P == B).
    x_p = jnp.pad(x, ((0, B_P - B), (0, 0)))

    def resident(a):  # same block every grid step -> weights/biases stay in VMEM
        return pl.BlockSpec(a.shape, lambda i: (0,) * a.ndim)

    flops = 2 * B_P * (K_IN * H1_PAD + H1_PAD * H2_PAD + H2_PAD * N_PAD)
    bytes_accessed = (x_p.size * 4 + B_P * N_PAD * 2
                      + (w1_p.size + w2_p.size + w3_p.size) * 2
                      + (b1_p.size + b2_p.size + b3_p.size) * 4)

    out = pl.pallas_call(
        mlp_kernel,
        out_shape=jax.ShapeDtypeStruct((B_P, N_PAD), jnp.bfloat16),
        grid=(n_steps,),
        in_specs=[
            pl.BlockSpec((TB, K_IN), lambda i: (i, 0)),   # streamed f32 x tile
            resident(w1_p), resident(b1_p),
            resident(w2_p), resident(b2_p),
            resident(w3_p), resident(b3_p),
        ],
        out_specs=pl.BlockSpec((TB, N_PAD), lambda i: (i, 0)),
        compiler_params=pltpu.CompilerParams(
            dimension_semantics=("parallel",),   # megacore / v7x 2-TC sharding
            vmem_limit_bytes=32 * 1024 * 1024,
        ),
        cost_estimate=pl.CostEstimate(
            flops=flops, transcendentals=0, bytes_accessed=bytes_accessed),
    )(x_p, w1_p, b1_p, w2_p, b2_p, w3_p, b3_p)

    # Slice away feature/batch padding; upcast the tiny (B, out) result to f32.
    return out[:B, :out_features].astype(jnp.float32)


def init_params(key, out_features=10):
    # Deterministic init mimicking PyTorch nn.Linear (uniform +/- 1/sqrt(fan_in)),
    # weights stored transposed as (in, out) so the kernel computes x @ W + b.
    def linear(k, fan_in, fan_out):
        kw, kb = jax.random.split(k)
        bound = 1.0 / jnp.sqrt(fan_in)
        w = jax.random.uniform(kw, (fan_in, fan_out), jnp.float32, -bound, bound)
        b = jax.random.uniform(kb, (1, fan_out), jnp.float32, -bound, bound)
        return w, b

    k1, k2, k3 = jax.random.split(key, 3)
    w1, b1 = linear(k1, 400, 120)
    w2, b2 = linear(k2, 120, 84)
    w3, b3 = linear(k3, 84, out_features)
    return (w1, b1, w2, b2, w3, b3)


def reference_forward(x, params):
    w1, b1, w2, b2, w3, b3 = params
    h1 = jnp.maximum(x @ w1 + b1, 0.0)
    h2 = jnp.maximum(h1 @ w2 + b2, 0.0)
    return h2 @ w3 + b3


if __name__ == "__main__":
    key = jax.random.PRNGKey(0)
    kx, kp = jax.random.split(key)
    B = 2
    x = jax.random.normal(kx, (B, 400), jnp.float32)
    params = init_params(kp, out_features=10)
    prepped, out_features = prepare_params(params)

    out = split_lenet3_forward(x, prepped, out_features=out_features)
    out = jax.block_until_ready(out)

    ref = reference_forward(x, params)
    assert out.shape == (B, 10)
    # bf16 matmul operands + bf16 output store, f32 accumulation -> loose tolerance.
    assert jnp.allclose(out, ref, atol=5e-2, rtol=5e-2), "mismatch vs reference"
    print("KERNEL_OK")
</pallas_src>

<mosaic_0001>
module attributes {stable_mosaic.version = 11 : i64} {
  func.func @mlp_kernel(%arg0: i32, %arg1: memref<8x400xf32, #tpu.memory_space<vmem>>, %arg2: memref<400x128xbf16, #tpu.memory_space<vmem>>, %arg3: memref<1x128xf32, #tpu.memory_space<vmem>>, %arg4: memref<128x128xbf16, #tpu.memory_space<vmem>>, %arg5: memref<1x128xf32, #tpu.memory_space<vmem>>, %arg6: memref<128x128xbf16, #tpu.memory_space<vmem>>, %arg7: memref<1x128xf32, #tpu.memory_space<vmem>>, %arg8: memref<8x128xbf16, #tpu.memory_space<vmem>>) attributes {dimension_semantics = [#tpu.dimension_semantics<parallel>], iteration_bounds = array<i64: 1>, scalar_prefetch = 0 : i64, scratch_operands = 0 : i64, tpu.core_type = #tpu.core_type<tc>, window_params = [{transform_indices = @transform_0, window_bounds = array<i64: 8, 400>}, {pipeline_mode = #tpu.pipeline_mode<synchronous>, transform_indices = @transform_1, window_bounds = array<i64: 400, 128>}, {pipeline_mode = #tpu.pipeline_mode<synchronous>, transform_indices = @transform_2, window_bounds = array<i64: 1, 128>}, {pipeline_mode = #tpu.pipeline_mode<synchronous>, transform_indices = @transform_3, window_bounds = array<i64: 128, 128>}, {pipeline_mode = #tpu.pipeline_mode<synchronous>, transform_indices = @transform_4, window_bounds = array<i64: 1, 128>}, {pipeline_mode = #tpu.pipeline_mode<synchronous>, transform_indices = @transform_5, window_bounds = array<i64: 128, 128>}, {pipeline_mode = #tpu.pipeline_mode<synchronous>, transform_indices = @transform_6, window_bounds = array<i64: 1, 128>}, {transform_indices = @transform_7, window_bounds = array<i64: 8, 128>}]} {
    %c0 = arith.constant 0 : index
    %c0_0 = arith.constant 0 : index
    %0 = vector.load %arg1[%c0, %c0_0] : memref<8x400xf32, #tpu.memory_space<vmem>>, vector<8x400xf32>
    %1 = arith.truncf %0 : vector<8x400xf32> to vector<8x400xbf16>
    %c0_1 = arith.constant 0 : index
    %c0_2 = arith.constant 0 : index
    %2 = vector.load %arg2[%c0_1, %c0_2] : memref<400x128xbf16, #tpu.memory_space<vmem>>, vector<400x128xbf16>
    %cst = arith.constant dense<0.000000e+00> : vector<8x128xf32>
    %3 = tpu.matmul %1, %2, %cst {dimension_numbers = #tpu.dot_dimension_numbers<[1], [0], [0], [1], [0, 0, 1, 1], [], []>} : vector<8x400xbf16>, vector<400x128xbf16>, vector<8x128xf32> -> vector<8x128xf32>
    %c0_3 = arith.constant 0 : index
    %c0_4 = arith.constant 0 : index
    %4 = vector.load %arg3[%c0_3, %c0_4] : memref<1x128xf32, #tpu.memory_space<vmem>>, vector<1x128xf32>
    %5 = vector.broadcast %4 : vector<1x128xf32> to vector<8x128xf32>
    %6 = arith.addf %3, %5 : vector<8x128xf32>
    %cst_5 = arith.constant 0.000000e+00 : f32
    %7 = vector.broadcast %cst_5 : f32 to vector<8x128xf32>
    %8 = arith.maximumf %6, %7 : vector<8x128xf32>
    %9 = arith.truncf %8 : vector<8x128xf32> to vector<8x128xbf16>
    %c0_6 = arith.constant 0 : index
    %c0_7 = arith.constant 0 : index
    %10 = vector.load %arg4[%c0_6, %c0_7] : memref<128x128xbf16, #tpu.memory_space<vmem>>, vector<128x128xbf16>
    %cst_8 = arith.constant dense<0.000000e+00> : vector<8x128xf32>
    %11 = tpu.matmul %9, %10, %cst_8 {dimension_numbers = #tpu.dot_dimension_numbers<[1], [0], [0], [1], [0, 0, 1, 1], [], []>} : vector<8x128xbf16>, vector<128x128xbf16>, vector<8x128xf32> -> vector<8x128xf32>
    %c0_9 = arith.constant 0 : index
    %c0_10 = arith.constant 0 : index
    %12 = vector.load %arg5[%c0_9, %c0_10] : memref<1x128xf32, #tpu.memory_space<vmem>>, vector<1x128xf32>
    %13 = vector.broadcast %12 : vector<1x128xf32> to vector<8x128xf32>
    %14 = arith.addf %11, %13 : vector<8x128xf32>
    %cst_11 = arith.constant 0.000000e+00 : f32
    %15 = vector.broadcast %cst_11 : f32 to vector<8x128xf32>
    %16 = arith.maximumf %14, %15 : vector<8x128xf32>
    %17 = arith.truncf %16 : vector<8x128xf32> to vector<8x128xbf16>
    %c0_12 = arith.constant 0 : index
    %c0_13 = arith.constant 0 : index
    %18 = vector.load %arg6[%c0_12, %c0_13] : memref<128x128xbf16, #tpu.memory_space<vmem>>, vector<128x128xbf16>
    %cst_14 = arith.constant dense<0.000000e+00> : vector<8x128xf32>
    %19 = tpu.matmul %17, %18, %cst_14 {dimension_numbers = #tpu.dot_dimension_numbers<[1], [0], [0], [1], [0, 0, 1, 1], [], []>} : vector<8x128xbf16>, vector<128x128xbf16>, vector<8x128xf32> -> vector<8x128xf32>
    %c0_15 = arith.constant 0 : index
    %c0_16 = arith.constant 0 : index
    %20 = vector.load %arg7[%c0_15, %c0_16] : memref<1x128xf32, #tpu.memory_space<vmem>>, vector<1x128xf32>
    %21 = vector.broadcast %20 : vector<1x128xf32> to vector<8x128xf32>
    %22 = arith.addf %19, %21 : vector<8x128xf32>
    %23 = arith.truncf %22 : vector<8x128xf32> to vector<8x128xbf16>
    %c0_17 = arith.constant 0 : index
    %c0_18 = arith.constant 0 : index
    %24 = vector.load %arg8[%c0_17, %c0_18] : memref<8x128xbf16, #tpu.memory_space<vmem>>, vector<8x128xbf16>
    tpu.vector_store %arg8[%c0_17, %c0_18], %23 {strides = array<i32>} : memref<8x128xbf16, #tpu.memory_space<vmem>>, vector<8x128xbf16>,
    return
  }
  func.func @transform_0(%arg0: i32) -> (i32, i32) {
    %c0_i32 = arith.constant 0 : i32
    %c0_i32_0 = arith.constant 0 : i32
    return %arg0, %c0_i32 : i32, i32
  }
  func.func @transform_1(%arg0: i32) -> (i32, i32) {
    %c0_i32 = arith.constant 0 : i32
    %c0_i32_0 = arith.constant 0 : i32
    %c0_i32_1 = arith.constant 0 : i32
    return %c0_i32, %c0_i32_0 : i32, i32
  }
  func.func @transform_2(%arg0: i32) -> (i32, i32) {
    %c0_i32 = arith.constant 0 : i32
    %c0_i32_0 = arith.constant 0 : i32
    %c0_i32_1 = arith.constant 0 : i32
    return %c0_i32, %c0_i32_0 : i32, i32
  }
  func.func @transform_3(%arg0: i32) -> (i32, i32) {
    %c0_i32 = arith.constant 0 : i32
    %c0_i32_0 = arith.constant 0 : i32
    %c0_i32_1 = arith.constant 0 : i32
    return %c0_i32, %c0_i32_0 : i32, i32
  }
  func.func @transform_4(%arg0: i32) -> (i32, i32) {
    %c0_i32 = arith.constant 0 : i32
    %c0_i32_0 = arith.constant 0 : i32
    %c0_i32_1 = arith.constant 0 : i32
    return %c0_i32, %c0_i32_0 : i32, i32
  }
  func.func @transform_5(%arg0: i32) -> (i32, i32) {
    %c0_i32 = arith.constant 0 : i32
    %c0_i32_0 = arith.constant 0 : i32
    %c0_i32_1 = arith.constant 0 : i32
    return %c0_i32, %c0_i32_0 : i32, i32
  }
  func.func @transform_6(%arg0: i32) -> (i32, i32) {
    %c0_i32 = arith.constant 0 : i32
    %c0_i32_0 = arith.constant 0 : i32
    %c0_i32_1 = arith.constant 0 : i32
    return %c0_i32, %c0_i32_0 : i32, i32
  }
  func.func @transform_7(%arg0: i32) -> (i32, i32) {
    %c0_i32 = arith.constant 0 : i32
    %c0_i32_0 = arith.constant 0 : i32
    return %arg0, %c0_i32 : i32, i32
  }
}

</mosaic_0001>

<llo_original>
// kernel: split_lenet3_forward.1
$region0: #{split_lenet3_forward.1}
  #allocation0 [shape = 'u32[]', space=smem, size = 0x4, offset = 0x4, fixed_abs, tag = 'smem constant byte address 0x4 - core index']
  #allocation1 [shape = 'u32[144,128]{1,0:T(1,128)}', space=vmem, size = 0x12000, scoped, tag = 'internal scratch']
  %s0 = inlined_call_operand.vmem [shape: f32[8,400], index: 0, kind: input, shape index: {}]
  %s1 = inlined_call_operand.hbm [shape: bf16[400,128], index: 1, kind: input, shape index: {}]
  %s2 = inlined_call_operand.vmem [shape: f32[1,128], index: 2, kind: input, shape index: {}]
  %s3 = inlined_call_operand.hbm [shape: bf16[128,128], index: 3, kind: input, shape index: {}]
  %s4 = inlined_call_operand.vmem [shape: f32[1,128], index: 4, kind: input, shape index: {}]
  %s5 = inlined_call_operand.hbm [shape: bf16[128,128], index: 5, kind: input, shape index: {}]
  %s6 = inlined_call_operand.vmem [shape: f32[1,128], index: 6, kind: input, shape index: {}]
  %s7 = inlined_call_operand.vmem [shape: bf16[8,128], index: 7, kind: output, shape index: {}]
  %s8 = sld [smem:[#allocation0]]
  $region50: #{split_lenet3_forward.1} parent=0
    _
  %s10 = ssub.s32 1, %s8
  %s11 = scalar_select 0, %s10, %s8
  $region1: #{split_lenet3_forward.1} parent=0
    #allocation2 [shape = 'u8[102400]{0}', space=vmem, size = 0x19000, scoped, tag = 'input window, operand 1, single buffered']
    #allocation3 [shape = 's32[1]{0}', space=sflag, size = 0x4, scoped, tag = 'scoped memory for split_lenet3_forward.1']
    #allocation4 [shape = 'u8[32768]{0}', space=vmem, size = 0x8000, scoped, tag = 'input window, operand 3, single buffered']
    #allocation5 [shape = 's32[1]{0}', space=sflag, size = 0x4, scoped, tag = 'scoped memory for split_lenet3_forward.1']
    #allocation6 [shape = 'u8[32768]{0}', space=vmem, size = 0x8000, scoped, tag = 'input window, operand 5, single buffered']
    %12 = vsyncpa [#allocation3], 0
    %13 = vsyncpa [#allocation5], 0
    // Predicated region
    $region2: #{split_lenet3_forward.1} parent=1 // pred_check
      _
    $region3: #{split_lenet3_forward.1} parent=1 // pred_check_branch
      %15 = sbr.rel (0) target = $region5
    $region4: #{split_lenet3_forward.1} parent=1 // pred_region
      _
    $region5: #{split_lenet3_forward.1} parent=1 // pred_fallthru
      _
    // Predicated region
    $region6: #{split_lenet3_forward.1} parent=1 // pred_check
      _
    $region7: #{split_lenet3_forward.1} parent=1 // pred_check_branch
      %17 = sbr.rel (0) target = $region9
    $region8: #{split_lenet3_forward.1} parent=1 // pred_region
      %s19 = ssub.s32 3200, 3200
      %20 = vsyncadd [#allocation3], %s19
      %s21 = sshll.u32 [#allocation2], 4
      %s22 = int_to_ptr.vmem [resolvable:$true] %s21
      %27 = dma.hbm_to_vmem [thread:$0]  %s1, 3200, %s22, [#allocation3], 64, 64, 4
    $region9: #{split_lenet3_forward.1} parent=1 // pred_fallthru
      _
    // Predicated region
    $region10: #{split_lenet3_forward.1} parent=1 // pred_check
      _
    $region11: #{split_lenet3_forward.1} parent=1 // pred_check_branch
      %29 = sbr.rel (0) target = $region13
    $region12: #{split_lenet3_forward.1} parent=1 // pred_region
      _
    $region13: #{split_lenet3_forward.1} parent=1 // pred_fallthru
      _
    // Predicated region
    $region14: #{split_lenet3_forward.1} parent=1 // pred_check
      _
    $region15: #{split_lenet3_forward.1} parent=1 // pred_check_branch
      %31 = sbr.rel (0) target = $region17
    $region16: #{split_lenet3_forward.1} parent=1 // pred_region
      %s33 = ssub.s32 1024, 1024
      %34 = vsyncadd [#allocation5], %s33
      %s35 = sshll.u32 [#allocation4], 4
      %s36 = int_to_ptr.vmem [resolvable:$true] %s35
      %41 = dma.hbm_to_vmem [thread:$0]  %s3, 1024, %s36, [#allocation5], 64, 64, 4
    $region17: #{split_lenet3_forward.1} parent=1 // pred_fallthru
      _
    // Predicated region
    $region18: #{split_lenet3_forward.1} parent=1 // pred_check
      _
    $region19: #{split_lenet3_forward.1} parent=1 // pred_check_branch
      %43 = sbr.rel (0) target = $region21
    $region20: #{split_lenet3_forward.1} parent=1 // pred_region
      _
    $region21: #{split_lenet3_forward.1} parent=1 // pred_fallthru
      _
    // Predicated region
    $region22: #{split_lenet3_forward.1} parent=1 // pred_check
      _
    $region23: #{split_lenet3_forward.1} parent=1 // pred_check_branch
      %45 = sbr.rel (0) target = $region25
    $region24: #{split_lenet3_forward.1} parent=1 // pred_region
      %s47 = ssub.s32 1024, 1024
      %48 = vsyncadd [#allocation5], %s47
      %s49 = sshll.u32 [#allocation6], 4
      %s50 = int_to_ptr.vmem [resolvable:$true] %s49
      %55 = dma.hbm_to_vmem [thread:$0]  %s5, 1024, %s50, [#allocation5], 64, 64, 4
    $region25: #{split_lenet3_forward.1} parent=1 // pred_fallthru
      _
    // Predicated region
    $region26: #{split_lenet3_forward.1} parent=1 // pred_check
      _
    $region27: #{split_lenet3_forward.1} parent=1 // pred_check_branch
      %57 = sbr.rel (0) target = $region29
    $region28: #{split_lenet3_forward.1} parent=1 // pred_region
      _
    $region29: #{split_lenet3_forward.1} parent=1 // pred_fallthru
      _
    // Predicated region
    $region30: #{split_lenet3_forward.1} parent=1 // pred_check
      _
    $region31: #{split_lenet3_forward.1} parent=1 // pred_check_branch
      %59 = sbr.rel (0) target = $region33
    $region32: #{split_lenet3_forward.1} parent=1 // pred_region
      %60 = dma.done [#allocation3], 3200
    $region33: #{split_lenet3_forward.1} parent=1 // pred_fallthru
      _
    // Predicated region
    $region34: #{split_lenet3_forward.1} parent=1 // pred_check
      _
    $region35: #{split_lenet3_forward.1} parent=1 // pred_check_branch
      %62 = sbr.rel (0) target = $region37
    $region36: #{split_lenet3_forward.1} parent=1 // pred_region
      %63 = dma.done [#allocation5], 1024
    $region37: #{split_lenet3_forward.1} parent=1 // pred_fallthru
      _
    // Predicated region
    $region38: #{split_lenet3_forward.1} parent=1 // pred_check
      _
    $region39: #{split_lenet3_forward.1} parent=1 // pred_check_branch
      %65 = sbr.rel (0) target = $region41
    $region40: #{split_lenet3_forward.1} parent=1 // pred_region
      %66 = dma.done [#allocation5], 1024
    $region41: #{split_lenet3_forward.1} parent=1 // pred_fallthru
      _
    %v68 = vld [vmem:[%s0] sm:$0xff]
    %v69 = vld [vmem:[%s0 + $0x8] sm:$0xff]
    %v70 = vld [vmem:[%s0 + $0x10] sm:$0xff]
    %v71 = vld [vmem:[%s0 + $0x18] sm:$0xff]
    %v72 = vpack.c.bf16 %v68, %v68
    %v73 = vpack.c.bf16 %v69, %v69
    %v74 = vpack.c.bf16 %v70, %v70
    %v75 = vpack.c.bf16 %v71, %v71
    %v76 = vld [vmem:[#allocation2] sm:$0xf]
    %v77 = vld [vmem:[#allocation2 + $0x4] sm:$0xf]
    %v78 = vld [vmem:[#allocation2 + $0x8] sm:$0xf]
    %v79 = vld [vmem:[#allocation2 + $0xc] sm:$0xf]
    %v80 = vld [vmem:[#allocation2 + $0x10] sm:$0xf]
    %v81 = vld [vmem:[#allocation2 + $0x14] sm:$0xf]
    %v82 = vld [vmem:[#allocation2 + $0x18] sm:$0xf]
    %v83 = vld [vmem:[#allocation2 + $0x1c] sm:$0xf]
    %v84 = vld [vmem:[#allocation2 + $0x20] sm:$0xf]
    %v85 = vld [vmem:[#allocation2 + $0x24] sm:$0xf]
    %v86 = vld [vmem:[#allocation2 + $0x28] sm:$0xf]
    %v87 = vld [vmem:[#allocation2 + $0x2c] sm:$0xf]
    %v88 = vld [vmem:[#allocation2 + $0x30] sm:$0xf]
    %v89 = vld [vmem:[#allocation2 + $0x34] sm:$0xf]
    %v90 = vld [vmem:[#allocation2 + $0x38] sm:$0xf]
    %v91 = vld [vmem:[#allocation2 + $0x3c] sm:$0xf]
    %v92 = vld [vmem:[#allocation2 + $0x40] sm:$0xf]
    %v93 = vld [vmem:[#allocation2 + $0x44] sm:$0xf]
    %v94 = vld [vmem:[#allocation2 + $0x48] sm:$0xf]
    %v95 = vld [vmem:[#allocation2 + $0x4c] sm:$0xf]
    %v96 = vld [vmem:[#allocation2 + $0x50] sm:$0xf]
    %v97 = vld [vmem:[#allocation2 + $0x54] sm:$0xf]
    %v98 = vld [vmem:[#allocation2 + $0x58] sm:$0xf]
    %v99 = vld [vmem:[#allocation2 + $0x5c] sm:$0xf]
    %v100 = vld [vmem:[#allocation2 + $0x60] sm:$0xf]
    %v101 = vld [vmem:[#allocation2 + $0x64] sm:$0xf]
    %v102 = vld [vmem:[#allocation2 + $0x68] sm:$0xf]
    %v103 = vld [vmem:[#allocation2 + $0x6c] sm:$0xf]
    %v104 = vld [vmem:[#allocation2 + $0x70] sm:$0xf]
    %v105 = vld [vmem:[#allocation2 + $0x74] sm:$0xf]
    %v106 = vld [vmem:[#allocation2 + $0x78] sm:$0xf]
    %v107 = vld [vmem:[#allocation2 + $0x7c] sm:$0xf]
    %v108 = vld [vmem:[#allocation2 + $0x80] sm:$0xf]
    %v109 = vld [vmem:[#allocation2 + $0x84] sm:$0xf]
    %v110 = vld [vmem:[#allocation2 + $0x88] sm:$0xf]
    %v111 = vld [vmem:[#allocation2 + $0x8c] sm:$0xf]
    %v112 = vld [vmem:[#allocation2 + $0x90] sm:$0xf]
    %v113 = vld [vmem:[#allocation2 + $0x94] sm:$0xf]
    %v114 = vld [vmem:[#allocation2 + $0x98] sm:$0xf]
    %v115 = vld [vmem:[#allocation2 + $0x9c] sm:$0xf]
    %v116 = vld [vmem:[#allocation2 + $0xa0] sm:$0xf]
    %v117 = vld [vmem:[#allocation2 + $0xa4] sm:$0xf]
    %v118 = vld [vmem:[#allocation2 + $0xa8] sm:$0xf]
    %v119 = vld [vmem:[#allocation2 + $0xac] sm:$0xf]
    %v120 = vld [vmem:[#allocation2 + $0xb0] sm:$0xf]
    %v121 = vld [vmem:[#allocation2 + $0xb4] sm:$0xf]
    %v122 = vld [vmem:[#allocation2 + $0xb8] sm:$0xf]
    %v123 = vld [vmem:[#allocation2 + $0xbc] sm:$0xf]
    %v124 = vld [vmem:[#allocation2 + $0xc0] sm:$0xf]
    %v125 = vld [vmem:[#allocation2 + $0xc4] sm:$0xf]
    %v126 = vld [vmem:[%s2] sm:$0x1]
    %v128 = vlaneseq
    %v129 = vshrl.u32 %v128, 7
    %v130 = vsub.s32 0, %v129
    %v131 = vrot.slane %v126, %v130
    %v183 = vunpack.c.l.b16 %v76
    %v184 = vunpack.c.l.b16 %v77
    %v185 = vunpack.c.l.b16 %v78
    %v186 = vunpack.c.l.b16 %v79
    %v187 = vunpack.c.l.b16 %v80
    %v188 = vunpack.c.l.b16 %v81
    %v189 = vunpack.c.l.b16 %v82
    %v190 = vunpack.c.l.b16 %v83
    %v191 = vunpack.c.l.b16 %v84
    %v192 = vunpack.c.l.b16 %v85
    %v193 = vunpack.c.l.b16 %v86
    %v194 = vunpack.c.l.b16 %v87
    %v195 = vunpack.c.l.b16 %v88
    %v196 = vunpack.c.l.b16 %v89
    %v197 = vunpack.c.l.b16 %v90
    %v198 = vunpack.c.l.b16 %v91
    %v199 = vunpack.c.l.b16 %v92
    %v200 = vunpack.c.l.b16 %v93
    %v201 = vunpack.c.l.b16 %v94
    %v202 = vunpack.c.l.b16 %v95
    %v203 = vunpack.c.l.b16 %v96
    %v204 = vunpack.c.l.b16 %v97
    %v205 = vunpack.c.l.b16 %v98
    %v206 = vunpack.c.l.b16 %v99
    %v207 = vunpack.c.l.b16 %v100
    %v208 = vunpack.c.l.b16 %v101
    %v209 = vunpack.c.l.b16 %v102
    %v210 = vunpack.c.l.b16 %v103
    %v211 = vunpack.c.l.b16 %v104
    %v212 = vunpack.c.l.b16 %v105
    %v213 = vunpack.c.l.b16 %v106
    %v214 = vunpack.c.l.b16 %v107
    %v215 = vunpack.c.l.b16 %v108
    %v216 = vunpack.c.l.b16 %v109
    %v217 = vunpack.c.l.b16 %v110
    %v218 = vunpack.c.l.b16 %v111
    %v219 = vunpack.c.l.b16 %v112
    %v220 = vunpack.c.l.b16 %v113
    %v221 = vunpack.c.l.b16 %v114
    %v222 = vunpack.c.l.b16 %v115
    %v223 = vunpack.c.l.b16 %v116
    %v224 = vunpack.c.l.b16 %v117
    %v225 = vunpack.c.l.b16 %v118
    %v226 = vunpack.c.l.b16 %v119
    %v227 = vunpack.c.l.b16 %v120
    %v228 = vunpack.c.l.b16 %v121
    %v229 = vunpack.c.l.b16 %v122
    %v230 = vunpack.c.l.b16 %v123
    %v231 = vunpack.c.l.b16 %v124
    %v232 = vunpack.c.l.b16 %v125
    %v233 = vpack.c.b16 %v184, %v183
    %v234 = vpack.c.b16 %v186, %v185
    %v235 = vpack.c.b16 %v188, %v187
    %v236 = vpack.c.b16 %v190, %v189
    %v237 = vpack.c.b16 %v192, %v191
    %v238 = vpack.c.b16 %v194, %v193
    %v239 = vpack.c.b16 %v196, %v195
    %v240 = vpack.c.b16 %v198, %v197
    %v241 = vpack.c.b16 %v200, %v199
    %v242 = vpack.c.b16 %v202, %v201
    %v243 = vpack.c.b16 %v204, %v203
    %v244 = vpack.c.b16 %v206, %v205
    %v245 = vpack.c.b16 %v208, %v207
    %v246 = vpack.c.b16 %v210, %v209
    %v247 = vpack.c.b16 %v212, %v211
    %v248 = vpack.c.b16 %v214, %v213
    %v249 = vpack.c.b16 %v216, %v215
    %v250 = vpack.c.b16 %v218, %v217
    %v251 = vpack.c.b16 %v220, %v219
    %v252 = vpack.c.b16 %v222, %v221
    %v253 = vpack.c.b16 %v224, %v223
    %v254 = vpack.c.b16 %v226, %v225
    %v255 = vpack.c.b16 %v228, %v227
    %v256 = vpack.c.b16 %v230, %v229
    %v257 = vpack.c.b16 %v232, %v231
    %vm283 = vcmask 130048
    %v285 = vsel %vm283, %v75, 0
    %287 = vmatprep.subr.bf16.mxu0 0
    %288 = vmatpush1.bf16.msra.mxu0 %v233
    %289 = vmatprep.subr.bf16.mxu0 0
    %290 = vmatpush1.bf16.msra.mxu0 %v234
    %291 = vmatprep.subr.bf16.mxu0 0
    %292 = vmatpush1.bf16.msra.mxu0 %v235
    %293 = vmatprep.subr.bf16.mxu0 0
    %294 = vmatpush1.bf16.msra.mxu0 %v236
    %295 = vmatprep.subr.bf16.mxu0 0
    %296 = vmatpush1.bf16.msra.mxu0 %v237
    %297 = vmatprep.subr.bf16.mxu0 0
    %298 = vmatpush1.bf16.msra.mxu0 %v238
    %299 = vmatprep.subr.bf16.mxu0 0
    %300 = vmatpush1.bf16.msra.mxu0 %v239
    %301 = vmatprep.subr.bf16.mxu0 0
    %302 = vmatpush1.bf16.msra.mxu0 %v240
    %303 = vmatprep.subr.bf16.mxu0 0
    %304 = vmatpush1.bf16.msra.mxu0 %v241
    %305 = vmatprep.subr.bf16.mxu0 0
    %306 = vmatpush1.bf16.msra.mxu0 %v242
    %307 = vmatprep.subr.bf16.mxu0 0
    %308 = vmatpush1.bf16.msra.mxu0 %v243
    %309 = vmatprep.subr.bf16.mxu0 0
    %310 = vmatpush1.bf16.msra.mxu0 %v244
    %311 = vmatprep.subr.bf16.mxu0 0
    %312 = vmatpush1.bf16.msra.mxu0 %v245
    %313 = vmatprep.subr.bf16.mxu0 0
    %314 = vmatpush1.bf16.msra.mxu0 %v246
    %315 = vmatprep.subr.bf16.mxu0 0
    %316 = vmatpush1.bf16.msra.mxu0 %v247
    %317 = vmatprep.subr.bf16.mxu0 0
    %318 = vmatpush1.bf16.msra.mxu0 %v248
    %319 = vmatprep.mubr.bf16.mxu0 %v73
    %320 = vmatmul.mubr.bf16.gmra.mrb[0].mxu0 %v72
    %v321 = vpop.f32.mrb[0].mxu0
    %v322 = vadd.f32 %v131, %v321
    %v323 = vpop.f32.mrb[0].mxu0
    %v324 = vpop.f32.mrb[0].mxu0
    %v325 = vpop.f32.mrb[0].mxu0
    %326 = vdwg.mxu0
    %327 = vmatprep.subr.bf16.mxu0 0
    %328 = vmatpush1.bf16.msra.mxu0 %v249
    %329 = vmatprep.subr.bf16.mxu0 0
    %330 = vmatpush1.bf16.msra.mxu0 %v250
    %331 = vmatprep.subr.bf16.mxu0 0
    %332 = vmatpush1.bf16.msra.mxu0 %v251
    %333 = vmatprep.subr.bf16.mxu0 0
    %334 = vmatpush1.bf16.msra.mxu0 %v252
    %335 = vmatprep.subr.bf16.mxu0 0
    %336 = vmatpush1.bf16.msra.mxu0 %v253
    %337 = vmatprep.subr.bf16.mxu0 0
    %338 = vmatpush1.bf16.msra.mxu0 %v254
    %339 = vmatprep.subr.bf16.mxu0 0
    %340 = vmatpush1.bf16.msra.mxu0 %v255
    %341 = vmatprep.subr.bf16.mxu0 0
    %342 = vmatpush1.bf16.msra.mxu0 %v256
    %343 = vmatprep.subr.bf16.mxu0 0
    %344 = vmatpush1.bf16.msra.mxu0 %v257
    %345 = vmatprep.subr.bf16.mxu0 0
    %346 = vmatpush1.bf16.msra.mxu0 0
    %347 = vmatprep.subr.bf16.mxu0 0
    %348 = vmatpush1.bf16.msra.mxu0 0
    %349 = vmatprep.subr.bf16.mxu0 0
    %350 = vmatpush1.bf16.msra.mxu0 0
    %351 = vmatprep.subr.bf16.mxu0 0
    %352 = vmatpush1.bf16.msra.mxu0 0
    %353 = vmatprep.subr.bf16.mxu0 0
    %354 = vmatpush1.bf16.msra.mxu0 0
    %355 = vmatprep.subr.bf16.mxu0 0
    %356 = vmatpush1.bf16.msra.mxu0 0
    %357 = vmatprep.subr.bf16.mxu0 0
    %358 = vmatpush1.bf16.msra.mxu0 0
    %359 = vmatprep.mubr.bf16.mxu0 %v285
    %360 = vmatmul.mubr.bf16.gmra.mrb[0].mxu0 %v74
    %v361 = vpop.f32.mrb[0].mxu0
    %v362 = vadd.f32 %v322, %v361
    %v363 = vpop.f32.mrb[0].mxu0
    %v364 = vpop.f32.mrb[0].mxu0
    %v365 = vpop.f32.mrb[0].mxu0
    %366 = vdwg.mxu0
    %v367 = vmax.f32 %v362, 0.0
    %v368 = vpack.c.bf16 %v367, %v367
    %v369 = vld [vmem:[#allocation4] sm:$0xf]
    %v370 = vld [vmem:[#allocation4 + $0x4] sm:$0xf]
    %v371 = vld [vmem:[#allocation4 + $0x8] sm:$0xf]
    %v372 = vld [vmem:[#allocation4 + $0xc] sm:$0xf]
    %v373 = vld [vmem:[#allocation4 + $0x10] sm:$0xf]
    %v374 = vld [vmem:[#allocation4 + $0x14] sm:$0xf]
    %v375 = vld [vmem:[#allocation4 + $0x18] sm:$0xf]
    %v376 = vld [vmem:[#allocation4 + $0x1c] sm:$0xf]
    %v377 = vld [vmem:[#allocation4 + $0x20] sm:$0xf]
    %v378 = vld [vmem:[#allocation4 + $0x24] sm:$0xf]
    %v379 = vld [vmem:[#allocation4 + $0x28] sm:$0xf]
    %v380 = vld [vmem:[#allocation4 + $0x2c] sm:$0xf]
    %v381 = vld [vmem:[#allocation4 + $0x30] sm:$0xf]
    %v382 = vld [vmem:[#allocation4 + $0x34] sm:$0xf]
    %v383 = vld [vmem:[#allocation4 + $0x38] sm:$0xf]
    %v384 = vld [vmem:[#allocation4 + $0x3c] sm:$0xf]
    %v385 = vld [vmem:[%s4] sm:$0x1]
    %v387 = vlaneseq
    %v388 = vshrl.u32 %v387, 7
    %v389 = vsub.s32 0, %v388
    %v390 = vrot.slane %v385, %v389
    %v408 = vunpack.c.l.b16 %v369
    %v409 = vunpack.c.l.b16 %v370
    %v410 = vunpack.c.l.b16 %v371
    %v411 = vunpack.c.l.b16 %v372
    %v412 = vunpack.c.l.b16 %v373
    %v413 = vunpack.c.l.b16 %v374
    %v414 = vunpack.c.l.b16 %v375
    %v415 = vunpack.c.l.b16 %v376
    %v416 = vunpack.c.l.b16 %v377
    %v417 = vunpack.c.l.b16 %v378
    %v418 = vunpack.c.l.b16 %v379
    %v419 = vunpack.c.l.b16 %v380
    %v420 = vunpack.c.l.b16 %v381
    %v421 = vunpack.c.l.b16 %v382
    %v422 = vunpack.c.l.b16 %v383
    %v423 = vunpack.c.l.b16 %v384
    %v424 = vpack.c.b16 %v409, %v408
    %v425 = vpack.c.b16 %v411, %v410
    %v426 = vpack.c.b16 %v413, %v412
    %v427 = vpack.c.b16 %v415, %v414
    %v428 = vpack.c.b16 %v417, %v416
    %v429 = vpack.c.b16 %v419, %v418
    %v430 = vpack.c.b16 %v421, %v420
    %v431 = vpack.c.b16 %v423, %v422
    %440 = vmatprep.subr.bf16.mxu0 0
    %441 = vmatpush1.bf16.msra.mxu0 %v424
    %442 = vmatprep.subr.bf16.mxu0 0
    %443 = vmatpush1.bf16.msra.mxu0 %v425
    %444 = vmatprep.subr.bf16.mxu0 0
    %445 = vmatpush1.bf16.msra.mxu0 %v426
    %446 = vmatprep.subr.bf16.mxu0 0
    %447 = vmatpush1.bf16.msra.mxu0 %v427
    %448 = vmatprep.subr.bf16.mxu0 0
    %449 = vmatpush1.bf16.msra.mxu0 %v428
    %450 = vmatprep.subr.bf16.mxu0 0
    %451 = vmatpush1.bf16.msra.mxu0 %v429
    %452 = vmatprep.subr.bf16.mxu0 0
    %453 = vmatpush1.bf16.msra.mxu0 %v430
    %454 = vmatprep.subr.bf16.mxu0 0
    %455 = vmatpush1.bf16.msra.mxu0 %v431
    %456 = vmatprep.subr.bf16.mxu0 0
    %457 = vmatpush1.bf16.msra.mxu0 0
    %458 = vmatprep.subr.bf16.mxu0 0
    %459 = vmatpush1.bf16.msra.mxu0 0
    %460 = vmatprep.subr.bf16.mxu0 0
    %461 = vmatpush1.bf16.msra.mxu0 0
    %462 = vmatprep.subr.bf16.mxu0 0
    %463 = vmatpush1.bf16.msra.mxu0 0
    %464 = vmatprep.subr.bf16.mxu0 0
    %465 = vmatpush1.bf16.msra.mxu0 0
    %466 = vmatprep.subr.bf16.mxu0 0
    %467 = vmatpush1.bf16.msra.mxu0 0
    %468 = vmatprep.subr.bf16.mxu0 0
    %469 = vmatpush1.bf16.msra.mxu0 0
    %470 = vmatprep.subr.bf16.mxu0 0
    %471 = vmatpush1.bf16.msra.mxu0 0
    %472 = vmatprep.mubr.bf16.mxu0 0
    %473 = vmatmul.mubr.bf16.gmra.mrb[0].mxu0 %v368
    %v474 = vpop.f32.mrb[0].mxu0
    %v475 = vadd.f32 %v390, %v474
    %v476 = vpop.f32.mrb[0].mxu0
    %v477 = vpop.f32.mrb[0].mxu0
    %v478 = vpop.f32.mrb[0].mxu0
    %479 = vdwg.mxu0
    %v480 = vmax.f32 %v475, 0.0
    %v481 = vpack.c.bf16 %v480, %v480
    %v482 = vld [vmem:[#allocation6] sm:$0xf]
    %v483 = vld [vmem:[#allocation6 + $0x4] sm:$0xf]
    %v484 = vld [vmem:[#allocation6 + $0x8] sm:$0xf]
    %v485 = vld [vmem:[#allocation6 + $0xc] sm:$0xf]
    %v486 = vld [vmem:[#allocation6 + $0x10] sm:$0xf]
    %v487 = vld [vmem:[#allocation6 + $0x14] sm:$0xf]
    %v488 = vld [vmem:[#allocation6 + $0x18] sm:$0xf]
    %v489 = vld [vmem:[#allocation6 + $0x1c] sm:$0xf]
    %v490 = vld [vmem:[#allocation6 + $0x20] sm:$0xf]
    %v491 = vld [vmem:[#allocation6 + $0x24] sm:$0xf]
    %v492 = vld [vmem:[#allocation6 + $0x28] sm:$0xf]
    %v493 = vld [vmem:[#allocation6 + $0x2c] sm:$0xf]
    %v494 = vld [vmem:[#allocation6 + $0x30] sm:$0xf]
    %v495 = vld [vmem:[#allocation6 + $0x34] sm:$0xf]
    %v496 = vld [vmem:[#allocation6 + $0x38] sm:$0xf]
    %v497 = vld [vmem:[#allocation6 + $0x3c] sm:$0xf]
    %v498 = vld [vmem:[%s6] sm:$0x1]
    %v500 = vlaneseq
    %v501 = vshrl.u32 %v500, 7
    %v502 = vsub.s32 0, %v501
    %v503 = vrot.slane %v498, %v502
    %v521 = vunpack.c.l.b16 %v482
    %v522 = vunpack.c.l.b16 %v483
    %v523 = vunpack.c.l.b16 %v484
    %v524 = vunpack.c.l.b16 %v485
    %v525 = vunpack.c.l.b16 %v486
    %v526 = vunpack.c.l.b16 %v487
    %v527 = vunpack.c.l.b16 %v488
    %v528 = vunpack.c.l.b16 %v489
    %v529 = vunpack.c.l.b16 %v490
    %v530 = vunpack.c.l.b16 %v491
    %v531 = vunpack.c.l.b16 %v492
    %v532 = vunpack.c.l.b16 %v493
    %v533 = vunpack.c.l.b16 %v494
    %v534 = vunpack.c.l.b16 %v495
    %v535 = vunpack.c.l.b16 %v496
    %v536 = vunpack.c.l.b16 %v497
    %v537 = vpack.c.b16 %v522, %v521
    %v538 = vpack.c.b16 %v524, %v523
    %v539 = vpack.c.b16 %v526, %v525
    %v540 = vpack.c.b16 %v528, %v527
    %v541 = vpack.c.b16 %v530, %v529
    %v542 = vpack.c.b16 %v532, %v531
    %v543 = vpack.c.b16 %v534, %v533
    %v544 = vpack.c.b16 %v536, %v535
    %553 = vmatprep.subr.bf16.mxu0 0
    %554 = vmatpush1.bf16.msra.mxu0 %v537
    %555 = vmatprep.subr.bf16.mxu0 0
    %556 = vmatpush1.bf16.msra.mxu0 %v538
    %557 = vmatprep.subr.bf16.mxu0 0
    %558 = vmatpush1.bf16.msra.mxu0 %v539
    %559 = vmatprep.subr.bf16.mxu0 0
    %560 = vmatpush1.bf16.msra.mxu0 %v540
    %561 = vmatprep.subr.bf16.mxu0 0
    %562 = vmatpush1.bf16.msra.mxu0 %v541
    %563 = vmatprep.subr.bf16.mxu0 0
    %564 = vmatpush1.bf16.msra.mxu0 %v542
    %565 = vmatprep.subr.bf16.mxu0 0
    %566 = vmatpush1.bf16.msra.mxu0 %v543
    %567 = vmatprep.subr.bf16.mxu0 0
    %568 = vmatpush1.bf16.msra.mxu0 %v544
    %569 = vmatprep.subr.bf16.mxu0 0
    %570 = vmatpush1.bf16.msra.mxu0 0
    %571 = vmatprep.subr.bf16.mxu0 0
    %572 = vmatpush1.bf16.msra.mxu0 0
    %573 = vmatprep.subr.bf16.mxu0 0
    %574 = vmatpush1.bf16.msra.mxu0 0
    %575 = vmatprep.subr.bf16.mxu0 0
    %576 = vmatpush1.bf16.msra.mxu0 0
    %577 = vmatprep.subr.bf16.mxu0 0
    %578 = vmatpush1.bf16.msra.mxu0 0
    %579 = vmatprep.subr.bf16.mxu0 0
    %580 = vmatpush1.bf16.msra.mxu0 0
    %581 = vmatprep.subr.bf16.mxu0 0
    %582 = vmatpush1.bf16.msra.mxu0 0
    %583 = vmatprep.subr.bf16.mxu0 0
    %584 = vmatpush1.bf16.msra.mxu0 0
    %585 = vmatprep.mubr.bf16.mxu0 0
    %586 = vmatmul.mubr.bf16.gmra.mrb[0].mxu0 %v481
    %v587 = vpop.f32.mrb[0].mxu0
    %v588 = vadd.f32 %v503, %v587
    %v589 = vpop.f32.mrb[0].mxu0
    %v590 = vpop.f32.mrb[0].mxu0
    %v591 = vpop.f32.mrb[0].mxu0
    %592 = vdwg.mxu0
    %v593 = vpack.c.bf16 %v588, %v588
    %594 = vst [vmem:[%s7] sm:$0xf] %v593
    // Predicated region
    $region42: #{split_lenet3_forward.1} parent=1 // pred_check
      _
    $region43: #{split_lenet3_forward.1} parent=1 // pred_check_branch
      %596 = sbr.rel (0) target = $region45
    $region44: #{split_lenet3_forward.1} parent=1 // pred_region
      _
    $region45: #{split_lenet3_forward.1} parent=1 // pred_fallthru
      _
    // Predicated region
    $region46: #{split_lenet3_forward.1} parent=1 // pred_check
      _
    $region47: #{split_lenet3_forward.1} parent=1 // pred_check_branch
      %598 = sbr.rel (0) target = $region49
    $region48: #{split_lenet3_forward.1} parent=1 // pred_region
      _
    $region49: #{split_lenet3_forward.1} parent=1 // pred_fallthru
      _
    %599 = vsyncpa [#allocation3], 1
    %600 = vsyncpa [#allocation5], 1

</llo_original>
